<compile_context>
chip_gen: v6e
topology: v6e:2x2x1
jax: 0.10.0
libtpu: 0.0.40
codegen_flags: <defaults>
</compile_context>

<pallas_src>
import functools

import jax
import jax.numpy as jnp
from jax import lax
from jax.experimental import pallas as pl
from jax.experimental.pallas import tpu as pltpu


def mhsa2_kernel(x_ref, wqkv_ref, bqkv_ref, mask_ref, wfbd_ref, bf_ref, o_ref,
                 *, scale, num_channels):
    """One batch element per grid step; everything channels-major and lane-dense.

    x_ref:    (C, S*L)    input slab for batch b (original layout, lanes = S*L)
    wqkv_ref: (3C, C)     qkv.weight
    bqkv_ref: (3C, 1)     qkv.bias as a column
    mask_ref: (S*L, S*L)  additive mask: 0 inside a subsequence block, -1e30 across
    wfbd_ref: (S*L, S*L)  kron(I_S, fc_out.weight^T)  (block-diagonal)
    bf_ref:   (1, S*L)    fc_out.bias tiled S times
    o_ref:    (C, S*L)    output slab for batch b
    """
    C = num_channels
    x = x_ref[...]                                             # (C, SL)

    # QKV projection: one MXU call, (3C, C) @ (C, SL) -> (3C, SL), all 128 lanes used.
    qkv = jnp.dot(wqkv_ref[...], x,
                  preferred_element_type=jnp.float32) + bqkv_ref[...]
    q = qkv[:C, :]
    k = qkv[C:2 * C, :]
    v = qkv[2 * C:, :]

    # Attention scores for all subsequences at once as one (SL, SL) gram matrix.
    # scores[i, j] = sum_c q[c, i] * k[c, j]  (contract channels; no materialized .T)
    scores = lax.dot_general(q, k, (((0,), (0,)), ((), ())),
                             preferred_element_type=jnp.float32)
    # Scale by 1/sqrt(seq_length) and mask cross-subsequence entries to -1e30 so the
    # softmax is exactly the per-subsequence softmax of the reference.
    scores = scores * scale + mask_ref[...]

    m = jnp.max(scores, axis=-1, keepdims=True)
    e = jnp.exp(scores - m)                                    # masked entries -> exactly 0
    denom = jnp.sum(e, axis=-1, keepdims=True)
    attn = e * pl.reciprocal(denom, approx=True)               # EUP reciprocal, no VPU divide

    # out[c, i] = sum_j v[c, j] * attn[i, j]   -> (C, SL), lane-dense
    out = lax.dot_general(v, attn, (((1,), (1,)), ((), ())),
                          preferred_element_type=jnp.float32)

    # fc_out applied per length-L chunk via the block-diagonal weight:
    # (C, SL) @ (SL, SL) + bias  -> (C, SL)
    final = jnp.dot(out, wfbd_ref[...],
                    preferred_element_type=jnp.float32) + bf_ref[...]
    o_ref[...] = final.astype(o_ref.dtype)


def multi_head_self_attention2(x, wqkv, bqkv, wf, bf):
    """x: (B, C, S, L) float32. Returns (B, C, S, L), matching the PyTorch module."""
    B, C, S, L = x.shape
    assert wf.shape == (L, L), "fc_out requires d_model == seq_length"
    SL = S * L

    # Free reshapes only (no HBM transposes): keep the original channels-major layout.
    x2 = x.reshape(B, C, SL)
    bqkv2 = bqkv.reshape(3 * C, 1)

    # Block-diagonal fc_out weight: block (s, s) = wf^T, so `out @ wf_bd` applies
    # fc_out independently to each length-L chunk of the lane dimension.
    eye_s = jnp.eye(S, dtype=x.dtype)
    wf_bd = jnp.kron(eye_s, wf.T)                                # (SL, SL)
    bf_t = jnp.tile(bf, S).reshape(1, SL)                        # (1, SL)

    # Additive attention mask: 0 within a subsequence, -1e30 across subsequences.
    blk = jnp.kron(eye_s, jnp.ones((L, L), dtype=x.dtype))
    neg_mask = (1.0 - blk) * jnp.asarray(-1e30, dtype=x.dtype)   # (SL, SL)

    kernel = functools.partial(mhsa2_kernel,
                               scale=float(1.0 / (L ** 0.5)),
                               num_channels=C)

    out = pl.pallas_call(
        kernel,
        out_shape=jax.ShapeDtypeStruct((B, C, SL), x.dtype),
        grid_spec=pltpu.PrefetchScalarGridSpec(
            num_scalar_prefetch=0,
            grid=(B,),                                # >= 2 parallel steps (v7x megacore)
            in_specs=[
                pl.BlockSpec((None, C, SL), lambda b: (b, 0, 0)),   # (C, SL) slab per batch
                pl.BlockSpec((3 * C, C), lambda b: (0, 0)),         # qkv.weight
                pl.BlockSpec((3 * C, 1), lambda b: (0, 0)),         # qkv.bias column
                pl.BlockSpec((SL, SL), lambda b: (0, 0)),           # additive block mask
                pl.BlockSpec((SL, SL), lambda b: (0, 0)),           # kron(I_S, wf^T)
                pl.BlockSpec((1, SL), lambda b: (0, 0)),            # fc_out.bias tiled
            ],
            out_specs=pl.BlockSpec((None, C, SL), lambda b: (b, 0, 0)),
        ),
        compiler_params=pltpu.CompilerParams(
            dimension_semantics=("parallel",)),
    )(x2, wqkv, bqkv2, neg_mask, wf_bd, bf_t)

    # (B, C, S*L) -> (B, C, S, L): free reshape, no data movement.
    return out.reshape(B, C, S, L)


def reference_forward(x, wqkv, bqkv, wf, bf):
    """Pure-JAX port of the PyTorch forward (for correctness check)."""
    B, C, S, L = x.shape
    xr = jnp.transpose(x, (0, 2, 3, 1))                 # (B, S, L, C)
    qkv = xr @ wqkv.T + bqkv                            # (B, S, L, 3C)
    q, k, v = jnp.split(qkv, 3, axis=-1)
    attn = (q @ jnp.swapaxes(k, -2, -1)) / (L ** 0.5)   # (B, S, L, L)
    attn = jax.nn.softmax(attn, axis=-1)
    out = attn @ v                                      # (B, S, L, C)
    out = jnp.transpose(out, (0, 3, 1, 2))              # (B, C, S, L)
    return out @ wf.T + bf                              # fc_out on last dim


if __name__ == "__main__":
    # Small shapes consistent with the module: d_model == seq_length required by fc_out.
    B = 2                 # batch
    C = 4                 # num_dims == num_channels
    S = 8                 # num_subsequences
    L = 16                # seq_length == d_model  (S*L = 128 -> lane-dense)
    # num_heads = 2 is unused by the forward pass.

    key = jax.random.PRNGKey(0)
    kx, kw1, kb1, kw2, kb2 = jax.random.split(key, 5)

    x = jax.random.normal(kx, (B, C, S, L), dtype=jnp.float32)
    wqkv = 0.1 * jax.random.normal(kw1, (3 * C, C), dtype=jnp.float32)   # qkv.weight
    bqkv = 0.1 * jax.random.normal(kb1, (3 * C,), dtype=jnp.float32)     # qkv.bias
    wf = 0.1 * jax.random.normal(kw2, (L, L), dtype=jnp.float32)         # fc_out.weight
    bf = 0.1 * jax.random.normal(kb2, (L,), dtype=jnp.float32)           # fc_out.bias

    y = multi_head_self_attention2(x, wqkv, bqkv, wf, bf)
    y = jax.block_until_ready(y)

    y_ref = reference_forward(x, wqkv, bqkv, wf, bf)
    assert y.shape == (B, C, S, L)
    # 1e-3 tolerance: pl.reciprocal(approx=True) in the softmax is an approximate EUP op.
    assert jnp.allclose(y, y_ref, rtol=1e-3, atol=1e-3), "Pallas kernel mismatch vs reference"

    print("KERNEL_OK")
</pallas_src>

<mosaic_0001>
module attributes {stable_mosaic.version = 11 : i64} {
  func.func @mhsa2_kernel(%arg0: i32, %arg1: memref<1x4x128xf32, #tpu.memory_space<vmem>>, %arg2: memref<12x4xf32, #tpu.memory_space<vmem>>, %arg3: memref<12x1xf32, #tpu.memory_space<vmem>>, %arg4: memref<128x128xf32, #tpu.memory_space<vmem>>, %arg5: memref<128x128xf32, #tpu.memory_space<vmem>>, %arg6: memref<1x128xf32, #tpu.memory_space<vmem>>, %arg7: memref<1x4x128xf32, #tpu.memory_space<vmem>>) attributes {dimension_semantics = [#tpu.dimension_semantics<parallel>], iteration_bounds = array<i64: 2>, scalar_prefetch = 0 : i64, scratch_operands = 0 : i64, tpu.core_type = #tpu.core_type<tc>, window_params = [{transform_indices = @transform_0, window_bounds = array<i64: 1, 4, 128>}, {pipeline_mode = #tpu.pipeline_mode<synchronous>, transform_indices = @transform_1, window_bounds = array<i64: 12, 4>}, {pipeline_mode = #tpu.pipeline_mode<synchronous>, transform_indices = @transform_2, window_bounds = array<i64: 12, 1>}, {pipeline_mode = #tpu.pipeline_mode<synchronous>, transform_indices = @transform_3, window_bounds = array<i64: 128, 128>}, {pipeline_mode = #tpu.pipeline_mode<synchronous>, transform_indices = @transform_4, window_bounds = array<i64: 128, 128>}, {pipeline_mode = #tpu.pipeline_mode<synchronous>, transform_indices = @transform_5, window_bounds = array<i64: 1, 128>}, {transform_indices = @transform_6, window_bounds = array<i64: 1, 4, 128>}]} {
    %c0 = arith.constant 0 : index
    %c0_0 = arith.constant 0 : index
    %c0_1 = arith.constant 0 : index
    %0 = vector.load %arg1[%c0, %c0_0, %c0_1] : memref<1x4x128xf32, #tpu.memory_space<vmem>>, vector<1x4x128xf32>
    %1 = vector.shape_cast %0 : vector<1x4x128xf32> to vector<4x128xf32>
    %c0_2 = arith.constant 0 : index
    %c0_3 = arith.constant 0 : index
    %2 = vector.load %arg2[%c0_2, %c0_3] : memref<12x4xf32, #tpu.memory_space<vmem>>, vector<12x4xf32>
    %cst = arith.constant dense<0.000000e+00> : vector<12x128xf32>
    %3 = tpu.matmul %2, %1, %cst {dimension_numbers = #tpu.dot_dimension_numbers<[1], [0], [0], [1], [0, 0, 1, 1], [], []>} : vector<12x4xf32>, vector<4x128xf32>, vector<12x128xf32> -> vector<12x128xf32>
    %c0_4 = arith.constant 0 : index
    %c0_5 = arith.constant 0 : index
    %4 = vector.load %arg3[%c0_4, %c0_5] : memref<12x1xf32, #tpu.memory_space<vmem>>, vector<12x1xf32>
    %5 = vector.broadcast %4 : vector<12x1xf32> to vector<12x128xf32>
    %6 = arith.addf %3, %5 : vector<12x128xf32>
    %7 = vector.extract_strided_slice %6 {offsets = [0, 0], sizes = [4, 128], strides = [1, 1]} : vector<12x128xf32> to vector<4x128xf32>
    %8 = vector.extract_strided_slice %6 {offsets = [4, 0], sizes = [4, 128], strides = [1, 1]} : vector<12x128xf32> to vector<4x128xf32>
    %9 = vector.extract_strided_slice %6 {offsets = [8, 0], sizes = [4, 128], strides = [1, 1]} : vector<12x128xf32> to vector<4x128xf32>
    %cst_6 = arith.constant dense<0.000000e+00> : vector<128x128xf32>
    %10 = tpu.matmul %7, %8, %cst_6 {dimension_numbers = #tpu.dot_dimension_numbers<[0], [0], [1], [1], [0, 1, 1, 1], [], []>} : vector<4x128xf32>, vector<4x128xf32>, vector<128x128xf32> -> vector<128x128xf32>
    %cst_7 = arith.constant 2.500000e-01 : f32
    %11 = vector.broadcast %cst_7 : f32 to vector<128x128xf32>
    %12 = arith.mulf %10, %11 : vector<128x128xf32>
    %c0_8 = arith.constant 0 : index
    %c0_9 = arith.constant 0 : index
    %13 = vector.load %arg4[%c0_8, %c0_9] : memref<128x128xf32, #tpu.memory_space<vmem>>, vector<128x128xf32>
    %14 = arith.addf %12, %13 : vector<128x128xf32>
    %cst_10 = arith.constant dense<0xFF800000> : vector<128xf32>
    %15 = vector.multi_reduction <maximumf>, %14, %cst_10 [1] : vector<128x128xf32> to vector<128xf32>
    %16 = vector.shape_cast %15 : vector<128xf32> to vector<128x1xf32>
    %17 = vector.broadcast %16 : vector<128x1xf32> to vector<128x128xf32>
    %18 = arith.subf %14, %17 : vector<128x128xf32>
    %19 = math.exp %18 : vector<128x128xf32>
    %cst_11 = arith.constant dense<0.000000e+00> : vector<128xf32>
    %20 = vector.multi_reduction <add>, %19, %cst_11 [1] : vector<128x128xf32> to vector<128xf32>
    %21 = vector.shape_cast %20 : vector<128xf32> to vector<128x1xf32>
    %22 = tpu.reciprocal %21 {approx = true} : vector<128x1xf32> -> vector<128x1xf32>
    %23 = vector.broadcast %22 : vector<128x1xf32> to vector<128x128xf32>
    %24 = arith.mulf %19, %23 : vector<128x128xf32>
    %cst_12 = arith.constant dense<0.000000e+00> : vector<4x128xf32>
    %25 = tpu.matmul %9, %24, %cst_12 {dimension_numbers = #tpu.dot_dimension_numbers<[1], [1], [0], [0], [0, 0, 1, 0], [], []>} : vector<4x128xf32>, vector<128x128xf32>, vector<4x128xf32> -> vector<4x128xf32>
    %c0_13 = arith.constant 0 : index
    %c0_14 = arith.constant 0 : index
    %26 = vector.load %arg5[%c0_13, %c0_14] : memref<128x128xf32, #tpu.memory_space<vmem>>, vector<128x128xf32>
    %cst_15 = arith.constant dense<0.000000e+00> : vector<4x128xf32>
    %27 = tpu.matmul %25, %26, %cst_15 {dimension_numbers = #tpu.dot_dimension_numbers<[1], [0], [0], [1], [0, 0, 1, 1], [], []>} : vector<4x128xf32>, vector<128x128xf32>, vector<4x128xf32> -> vector<4x128xf32>
    %c0_16 = arith.constant 0 : index
    %c0_17 = arith.constant 0 : index
    %28 = vector.load %arg6[%c0_16, %c0_17] : memref<1x128xf32, #tpu.memory_space<vmem>>, vector<1x128xf32>
    %29 = vector.broadcast %28 : vector<1x128xf32> to vector<4x128xf32>
    %30 = arith.addf %27, %29 : vector<4x128xf32>
    %c0_18 = arith.constant 0 : index
    %c0_19 = arith.constant 0 : index
    %c0_20 = arith.constant 0 : index
    %31 = vector.load %arg7[%c0_18, %c0_19, %c0_20] : memref<1x4x128xf32, #tpu.memory_space<vmem>>, vector<1x4x128xf32>
    %32 = vector.shape_cast %31 : vector<1x4x128xf32> to vector<4x128xf32>
    %33 = vector.shape_cast %30 : vector<4x128xf32> to vector<1x4x128xf32>
    tpu.vector_store %arg7[%c0_18, %c0_19, %c0_20], %33 {strides = array<i32>} : memref<1x4x128xf32, #tpu.memory_space<vmem>>, vector<1x4x128xf32>,
    return
  }
  func.func @transform_0(%arg0: i32) -> (i32, i32, i32) {
    %c0_i32 = arith.constant 0 : i32
    %c0_i32_0 = arith.constant 0 : i32
    %c0_i32_1 = arith.constant 0 : i32
    return %arg0, %c0_i32, %c0_i32_0 : i32, i32, i32
  }
  func.func @transform_1(%arg0: i32) -> (i32, i32) {
    %c0_i32 = arith.constant 0 : i32
    %c0_i32_0 = arith.constant 0 : i32
    %c0_i32_1 = arith.constant 0 : i32
    return %c0_i32, %c0_i32_0 : i32, i32
  }
  func.func @transform_2(%arg0: i32) -> (i32, i32) {
    %c0_i32 = arith.constant 0 : i32
    %c0_i32_0 = arith.constant 0 : i32
    %c0_i32_1 = arith.constant 0 : i32
    return %c0_i32, %c0_i32_0 : i32, i32
  }
  func.func @transform_3(%arg0: i32) -> (i32, i32) {
    %c0_i32 = arith.constant 0 : i32
    %c0_i32_0 = arith.constant 0 : i32
    %c0_i32_1 = arith.constant 0 : i32
    return %c0_i32, %c0_i32_0 : i32, i32
  }
  func.func @transform_4(%arg0: i32) -> (i32, i32) {
    %c0_i32 = arith.constant 0 : i32
    %c0_i32_0 = arith.constant 0 : i32
    %c0_i32_1 = arith.constant 0 : i32
    return %c0_i32, %c0_i32_0 : i32, i32
  }
  func.func @transform_5(%arg0: i32) -> (i32, i32) {
    %c0_i32 = arith.constant 0 : i32
    %c0_i32_0 = arith.constant 0 : i32
    %c0_i32_1 = arith.constant 0 : i32
    return %c0_i32, %c0_i32_0 : i32, i32
  }
  func.func @transform_6(%arg0: i32) -> (i32, i32, i32) {
    %c0_i32 = arith.constant 0 : i32
    %c0_i32_0 = arith.constant 0 : i32
    %c0_i32_1 = arith.constant 0 : i32
    return %arg0, %c0_i32, %c0_i32_0 : i32, i32, i32
  }
}

</mosaic_0001>

<llo_original>
// kernel: tpu_custom_call.1
$region0: #{tpu_custom_call.1}
  #allocation0 [shape = 'u32[]', space=smem, size = 0x4, offset = 0x4, fixed_abs, tag = 'smem constant byte address 0x4 - core index']
  #allocation1 [shape = 'u32[144,128]{1,0:T(1,128)}', space=vmem, size = 0x12000, scoped, tag = 'internal scratch']
  %s0 = inlined_call_operand.vmem [shape: f32[2,4,128], index: 0, kind: input, shape index: {}]
  %s1 = inlined_call_operand.vmem [shape: f32[12,4], index: 1, kind: input, shape index: {}]
  %s2 = inlined_call_operand.vmem [shape: f32[12,1], index: 2, kind: input, shape index: {}]
  %s3 = inlined_call_operand.hbm [shape: f32[128,128], index: 3, kind: input, shape index: {}]
  %s4 = inlined_call_operand.hbm [shape: f32[128,128], index: 4, kind: input, shape index: {}]
  %s5 = inlined_call_operand.vmem [shape: f32[1,128], index: 5, kind: input, shape index: {}]
  %s6 = inlined_call_operand.hbm [shape: f32[2,4,128], index: 6, kind: output, shape index: {}]
  %s7 = sld [smem:[#allocation0]]
  $region65: #{tpu_custom_call.1} parent=0
    _
  %s9 = ssub.s32 1, %s7
  %s10 = scalar_select 0, %s9, %s7
  $region1: #{tpu_custom_call.1} parent=0
    #allocation2 [shape = 'u8[65536]{0}', space=vmem, size = 0x10000, scoped, tag = 'input window, operand 3, single buffered']
    #allocation3 [shape = 's32[2]{0}', space=sflag, size = 0x8, scoped, tag = 'scoped memory for tpu_custom_call.1']
    #allocation4 [shape = 's32[2]{0}', space=sflag, size = 0x8, scoped, tag = 'scoped memory for tpu_custom_call.1']
    #allocation5 [shape = 'u8[65536]{0}', space=vmem, size = 0x10000, scoped, tag = 'input window, operand 4, single buffered']
    #allocation6 [shape = 's32[1]{0}', space=sflag, size = 0x4, scoped, tag = 'scoped memory for tpu_custom_call.1']
    #allocation7 [shape = 'u8[4096]{0}', space=vmem, size = 0x1000, scoped, tag = 'output window, operand 0']
    %11 = vsyncpa [#allocation3], 0
    %12 = vsyncpa [#allocation6], 0
    %13 = vsyncpa [#allocation4], 0
    %s14 = scalar_lea.sflag [#allocation4], 1
    %15 = vsyncpa %s14, 0
    loop: start=0, step=1, limit=4
    $region2: #{tpu_custom_call.1} parent=1 // loop_pre_header
      _
    $region3: #{tpu_custom_call.1} parent=1 // loop_header
      %s17 = sphi 0, %s21
      %p18 = scmp.ge.s32.totalorder %s17, 4
      %s27 = sphi 0, %s29
      %s30 = sphi 0, %s27
      %s31 = sphi 0, %s30
      %s47 = sphi 0, %s31
      %s51 = sphi 0, %s51
      %s53 = sphi 0, %s51
      %s54 = sphi 0, %s53
      %s68 = sphi 0, %s54
      %s72 = sphi 0, %s72
      %s74 = sphi 0, %s72
      %s75 = sphi 0, %s74
      %s89 = sphi 0, %s75
      %s93 = sphi 0, %s93
      %s95 = sphi 0, %s93
      %s96 = sphi 0, %s95
      %s110 = sphi 0, %s96
      %s114 = sphi 0, %s114
      %s116 = sphi 0, %s114
      %s117 = sphi 0, %s116
      %s131 = sphi 0, %s117
      %s135 = sphi 0, %s135
      %s137 = sphi 0, %s135
      %s138 = sphi 0, %s137
      %s152 = sphi 0, %s138
      %s158 = sphi 0, %s160
      %s161 = sphi 0, %s158
      %s162 = sphi 0, %s161
      %s178 = sphi 0, %s162
    $region4: #{tpu_custom_call.1} parent=1 // loop_header_branch
      %20 = sbr.rel (%p18) target = $region8
    $region5: #{tpu_custom_call.1} parent=1 // loop_body
      %s22 = ssub.s32 %s17, 1
      %s23 = ssub.s32 %s17, 2
      %s24 = sadd.s32 %s17, 1
      %s25 = ssub.s32 %s17, %s24
      %p26 = scmp.eq.s32.totalorder %s25, 0
      %s28 = sadd.s32 %s27, 1
      %s29 = scalar_select %p26, %s27, %s28
      %p32 = pneg %p26
      %p33 = scmp.eq.s32.totalorder %s17, 1
      %p34 = por %p32, %p33
      %p35 = scmp.ne.s32.totalorder %s27, %s30
      %p36 = scmp.eq.s32.totalorder %s17, 0
      %p37 = por %p35, %p36
      %p38 = scmp.ne.s32.totalorder %s27, %s30
      %p39 = scmp.eq.s32.totalorder %s22, 1
      %p40 = por %p38, %p39
      %p41 = scmp.ne.s32.totalorder %s30, %s31
      %p42 = scmp.eq.s32.totalorder %s22, 0
      %p43 = por %p41, %p42
      %p44 = scmp.ne.s32.totalorder %s30, %s31
      %p45 = scmp.eq.s32.totalorder %s23, 1
      %p46 = por %p44, %p45
      %p48 = scmp.ne.s32.totalorder %s31, %s47
      %p49 = scmp.eq.s32.totalorder %s23, 0
      %p50 = por %p48, %p49
      %s52 = sadd.s32 %s51, 1
      %p55 = scmp.eq.s32.totalorder %s17, 1
      %p56 = scmp.ne.s32.totalorder %s51, %s53
      %p57 = scmp.eq.s32.totalorder %s17, 0
      %p58 = por %p56, %p57
      %p59 = scmp.ne.s32.totalorder %s51, %s53
      %p60 = scmp.eq.s32.totalorder %s22, 1
      %p61 = por %p59, %p60
      %p62 = scmp.ne.s32.totalorder %s53, %s54
      %p63 = scmp.eq.s32.totalorder %s22, 0
      %p64 = por %p62, %p63
      %p65 = scmp.ne.s32.totalorder %s53, %s54
      %p66 = scmp.eq.s32.totalorder %s23, 1
      %p67 = por %p65, %p66
      %p69 = scmp.ne.s32.totalorder %s54, %s68
      %p70 = scmp.eq.s32.totalorder %s23, 0
      %p71 = por %p69, %p70
      %s73 = sadd.s32 %s72, 1
      %p76 = scmp.eq.s32.totalorder %s17, 1
      %p77 = scmp.ne.s32.totalorder %s72, %s74
      %p78 = scmp.eq.s32.totalorder %s17, 0
      %p79 = por %p77, %p78
      %p80 = scmp.ne.s32.totalorder %s72, %s74
      %p81 = scmp.eq.s32.totalorder %s22, 1
      %p82 = por %p80, %p81
      %p83 = scmp.ne.s32.totalorder %s74, %s75
      %p84 = scmp.eq.s32.totalorder %s22, 0
      %p85 = por %p83, %p84
      %p86 = scmp.ne.s32.totalorder %s74, %s75
      %p87 = scmp.eq.s32.totalorder %s23, 1
      %p88 = por %p86, %p87
      %p90 = scmp.ne.s32.totalorder %s75, %s89
      %p91 = scmp.eq.s32.totalorder %s23, 0
      %p92 = por %p90, %p91
      %s94 = sadd.s32 %s93, 1
      %p97 = scmp.eq.s32.totalorder %s17, 1
      %p98 = scmp.ne.s32.totalorder %s93, %s95
      %p99 = scmp.eq.s32.totalorder %s17, 0
      %p100 = por %p98, %p99
      %p101 = scmp.ne.s32.totalorder %s93, %s95
      %p102 = scmp.eq.s32.totalorder %s22, 1
      %p103 = por %p101, %p102
      %p104 = scmp.ne.s32.totalorder %s95, %s96
      %p105 = scmp.eq.s32.totalorder %s22, 0
      %p106 = por %p104, %p105
      %p107 = scmp.ne.s32.totalorder %s95, %s96
      %p108 = scmp.eq.s32.totalorder %s23, 1
      %p109 = por %p107, %p108
      %p111 = scmp.ne.s32.totalorder %s96, %s110
      %p112 = scmp.eq.s32.totalorder %s23, 0
      %p113 = por %p111, %p112
      %s115 = sadd.s32 %s114, 1
      %p118 = scmp.eq.s32.totalorder %s17, 1
      %p119 = scmp.ne.s32.totalorder %s114, %s116
      %p120 = scmp.eq.s32.totalorder %s17, 0
      %p121 = por %p119, %p120
      %p122 = scmp.ne.s32.totalorder %s114, %s116
      %p123 = scmp.eq.s32.totalorder %s22, 1
      %p124 = por %p122, %p123
      %p125 = scmp.ne.s32.totalorder %s116, %s117
      %p126 = scmp.eq.s32.totalorder %s22, 0
      %p127 = por %p125, %p126
      %p128 = scmp.ne.s32.totalorder %s116, %s117
      %p129 = scmp.eq.s32.totalorder %s23, 1
      %p130 = por %p128, %p129
      %p132 = scmp.ne.s32.totalorder %s117, %s131
      %p133 = scmp.eq.s32.totalorder %s23, 0
      %p134 = por %p132, %p133
      %s136 = sadd.s32 %s135, 1
      %p139 = scmp.eq.s32.totalorder %s17, 1
      %p140 = scmp.ne.s32.totalorder %s135, %s137
      %p141 = scmp.eq.s32.totalorder %s17, 0
      %p142 = por %p140, %p141
      %p143 = scmp.ne.s32.totalorder %s135, %s137
      %p144 = scmp.eq.s32.totalorder %s22, 1
      %p145 = por %p143, %p144
      %p146 = scmp.ne.s32.totalorder %s137, %s138
      %p147 = scmp.eq.s32.totalorder %s22, 0
      %p148 = por %p146, %p147
      %p149 = scmp.ne.s32.totalorder %s137, %s138
      %p150 = scmp.eq.s32.totalorder %s23, 1
      %p151 = por %p149, %p150
      %p153 = scmp.ne.s32.totalorder %s138, %s152
      %p154 = scmp.eq.s32.totalorder %s23, 0
      %p155 = por %p153, %p154
      %s156 = ssub.s32 %s17, %s24
      %p157 = scmp.eq.s32.totalorder %s156, 0
      %s159 = sadd.s32 %s158, 1
      %s160 = scalar_select %p157, %s158, %s159
      %p163 = pneg %p157
      %p164 = scmp.eq.s32.totalorder %s17, 1
      %p165 = por %p163, %p164
      %p166 = scmp.ne.s32.totalorder %s158, %s161
      %p167 = scmp.eq.s32.totalorder %s17, 0
      %p168 = por %p166, %p167
      %p169 = scmp.ne.s32.totalorder %s158, %s161
      %p170 = scmp.eq.s32.totalorder %s22, 1
      %p171 = por %p169, %p170
      %p172 = scmp.ne.s32.totalorder %s161, %s162
      %p173 = scmp.eq.s32.totalorder %s22, 0
      %p174 = por %p172, %p173
      %p175 = scmp.ne.s32.totalorder %s161, %s162
      %p176 = scmp.eq.s32.totalorder %s23, 1
      %p177 = por %p175, %p176
      %p179 = scmp.ne.s32.totalorder %s162, %s178
      %p180 = scmp.eq.s32.totalorder %s23, 0
      %p181 = por %p179, %p180
      %p182 = scmp.le.s32.totalorder 1, %s17
      %p183 = scmp.lt.s32.totalorder %s17, 3
      %p184 = pnand %p182, %p183
      %p185 = pneg %p184
      // Predicated region
      $region9: #{tpu_custom_call.1} parent=5 // pred_check
        _
      $region10: #{tpu_custom_call.1} parent=5 // pred_check_branch
        %187 = sbr.rel (%p184) target = $region12
      $region11: #{tpu_custom_call.1} parent=5 // pred_region
        %s188 = ssub.s32 %s17, 1
        // Predicated region
        $region13: #{tpu_custom_call.1} parent=11 // pred_check
          %p189 = pneg %p64
        $region14: #{tpu_custom_call.1} parent=11 // pred_check_branch
          %191 = sbr.rel (%p189) target = $region16
        $region15: #{tpu_custom_call.1} parent=11 // pred_region
          _
        $region16: #{tpu_custom_call.1} parent=11 // pred_fallthru
          _
        // Predicated region
        $region17: #{tpu_custom_call.1} parent=11 // pred_check
          %p192 = pneg %p85
        $region18: #{tpu_custom_call.1} parent=11 // pred_check_branch
          %194 = sbr.rel (%p192) target = $region20
        $region19: #{tpu_custom_call.1} parent=11 // pred_region
          _
        $region20: #{tpu_custom_call.1} parent=11 // pred_fallthru
          _
        // Predicated region
        $region21: #{tpu_custom_call.1} parent=11 // pred_check
          %p195 = pneg %p106
        $region22: #{tpu_custom_call.1} parent=11 // pred_check_branch
          %197 = sbr.rel (%p195) target = $region24
        $region23: #{tpu_custom_call.1} parent=11 // pred_region
          %s199 = ssub.s32 2048, 2048
          %200 = vsyncadd [#allocation3], %s199
          %s201 = sshll.u32 [#allocation2], 4
          %s202 = int_to_ptr.vmem [resolvable:$true] %s201
          %207 = dma.hbm_to_vmem [thread:$0]  %s3, 2048, %s202, [#allocation3], 128, 128, 8
        $region24: #{tpu_custom_call.1} parent=11 // pred_fallthru
          _
        // Predicated region
        $region25: #{tpu_custom_call.1} parent=11 // pred_check
          %p208 = pneg %p127
        $region26: #{tpu_custom_call.1} parent=11 // pred_check_branch
          %210 = sbr.rel (%p208) target = $region28
        $region27: #{tpu_custom_call.1} parent=11 // pred_region
          %s212 = ssub.s32 2048, 2048
          %213 = vsyncadd [#allocation6], %s212
          %s214 = sshll.u32 [#allocation5], 4
          %s215 = int_to_ptr.vmem [resolvable:$true] %s214
          %220 = dma.hbm_to_vmem [thread:$0]  %s4, 2048, %s215, [#allocation6], 128, 128, 8
        $region28: #{tpu_custom_call.1} parent=11 // pred_fallthru
          _
        // Predicated region
        $region29: #{tpu_custom_call.1} parent=11 // pred_check
          %p221 = pneg %p148
        $region30: #{tpu_custom_call.1} parent=11 // pred_check_branch
          %223 = sbr.rel (%p221) target = $region32
        $region31: #{tpu_custom_call.1} parent=11 // pred_region
          _
        $region32: #{tpu_custom_call.1} parent=11 // pred_fallthru
          _
      $region12: #{tpu_custom_call.1} parent=5 // pred_fallthru
        _
      %p224 = scmp.lt.s32.totalorder %s17, 2
      // Predicated region
      $region33: #{tpu_custom_call.1} parent=5 // pred_check
        %p225 = pneg %p224
      $region34: #{tpu_custom_call.1} parent=5 // pred_check_branch
        %227 = sbr.rel (%p225) target = $region36
      $region35: #{tpu_custom_call.1} parent=5 // pred_region
        // Predicated region
        $region37: #{tpu_custom_call.1} parent=35 // pred_check
          %p228 = pneg %p37
        $region38: #{tpu_custom_call.1} parent=35 // pred_check_branch
          %230 = sbr.rel (%p228) target = $region40
        $region39: #{tpu_custom_call.1} parent=35 // pred_region
          %p231 = scmp.lt.s32.totalorder %s17, 1
          %s232 = scalar_select %p231, %s17, 1
          %s233 = smul.addr %s232, 4
          %s234 = scalar_lea.vmem %s0, %s233
        $region40: #{tpu_custom_call.1} parent=35 // pred_fallthru
          _
      $region36: #{tpu_custom_call.1} parent=5 // pred_fallthru
        _
      %p235 = scmp.le.s32.totalorder 1, %s17
      %p236 = scmp.lt.s32.totalorder %s17, 3
      %p237 = pnand %p235, %p236
      %p238 = pneg %p237
      // Predicated region
      $region41: #{tpu_custom_call.1} parent=5 // pred_check
        _
      $region42: #{tpu_custom_call.1} parent=5 // pred_check_branch
        %240 = sbr.rel (%p237) target = $region44
      $region43: #{tpu_custom_call.1} parent=5 // pred_region
        %s241 = ssub.s32 %s17, 1
        // Predicated region
        $region45: #{tpu_custom_call.1} parent=43 // pred_check
          %p242 = pneg %p106
        $region46: #{tpu_custom_call.1} parent=43 // pred_check_branch
          %244 = sbr.rel (%p242) target = $region48
        $region47: #{tpu_custom_call.1} parent=43 // pred_region
          %245 = dma.done [#allocation3], 2048
        $region48: #{tpu_custom_call.1} parent=43 // pred_fallthru
          _
        // Predicated region
        $region49: #{tpu_custom_call.1} parent=43 // pred_check
          %p246 = pneg %p127
        $region50: #{tpu_custom_call.1} parent=43 // pred_check_branch
          %248 = sbr.rel (%p246) target = $region52
        $region51: #{tpu_custom_call.1} parent=43 // pred_region
          %249 = dma.done [#allocation6], 2048
        $region52: #{tpu_custom_call.1} parent=43 // pred_fallthru
          _
        %p250 = scmp.lt.s32.totalorder %s22, 1
        %s251 = scalar_select %p250, %s22, 1
        %s252 = smul.addr %s251, 4
        %s253 = scalar_lea.vmem %s0, %s252
        %p254 = pneg %p43
        %p255 = pneg %p40
        %p256 = pneg %p64
        %p257 = pneg %p61
        %p258 = pneg %p85
        %p259 = pneg %p82
        %p260 = pneg %p106
        %p261 = pneg %p103
        %p262 = pneg %p127
        %p263 = pneg %p124
        %p264 = pneg %p148
        %p265 = pneg %p145
        %p266 = pneg %p174
        %p267 = pneg %p171
        %s268 = sand.u32 %s161, 1
        %s269 = scalar_lea.sflag [#allocation4], %s268
        %s270 = sand.u32 %s161, 1
        %s271 = smul.addr %s270, 4
        %s272 = scalar_lea.vmem [#allocation7], %s271
        %p273 = scmp.lt.s32.totalorder %s22, 1
        %s274 = scalar_select %p273, %s22, 1
        %s275 = smul.addr %s274, 4
        %s276 = scalar_lea.vmem %s0, %s275
        %v277 = vld [vmem:[%s276] sm:$0xf]
        %v278 = vld [vmem:[%s1] sm:$0xff]
        %v279 = vld [vmem:[%s1 + $0x8] sm:$0xf]
        %v280 = vld [vmem:[%s2] sm:$0xff]
        %v281 = vld [vmem:[%s2 + $0x8] sm:$0xf]
        %283 = vset.pattern.permute.xlu0 0
        %284 = vperm.xlu0 %283, %v280
        %v285 = vpop.permute.xlu0 %284
        %288 = vset.pattern.permute.xlu0 0
        %289 = vperm.xlu0 %288, %v281
        %v290 = vpop.permute.xlu0 %289
        %vm292 = vcmask 31744
        %v294 = vsel %vm292, %v278, 0
        %v297 = vsel %vm292, %v279, 0
        %vm299 = vcmask 1043456
        %v301 = vsel %vm299, %v277, 0
        %303 = vmatprep.subr.mxu0 0.0
        %304 = vmatpush1.msra.mxu0 0.0
        %305 = vmatprep.subr.mxu0 0.0
        %306 = vmatpush1.msra.mxu0 0.0
        %307 = vmatprep.subr.mxu0 0.0
        %308 = vmatpush1.msra.mxu0 0.0
        %309 = vmatprep.subr.mxu0 0.0
        %310 = vmatpush1.msra.mxu0 0.0
        %311 = vmatprep.subr.mxu0 0.0
        %312 = vmatpush1.msra.mxu0 0.0
        %313 = vmatprep.subr.mxu0 0.0
        %314 = vmatpush1.msra.mxu0 0.0
        %315 = vmatprep.subr.mxu0 0.0
        %316 = vmatpush1.msra.mxu0 0.0
        %317 = vmatprep.subr.mxu0 0.0
        %318 = vmatpush1.msra.mxu0 0.0
        %319 = vmatprep.subr.mxu0 0.0
        %320 = vmatpush1.msra.mxu0 0.0
        %321 = vmatprep.subr.mxu0 0.0
        %322 = vmatpush1.msra.mxu0 0.0
        %323 = vmatprep.subr.mxu0 0.0
        %324 = vmatpush1.msra.mxu0 0.0
        %325 = vmatprep.subr.mxu0 0.0
        %326 = vmatpush1.msra.mxu0 0.0
        %327 = vmatprep.subr.mxu0 0.0
        %328 = vmatpush1.msra.mxu0 0.0
        %329 = vmatprep.subr.mxu0 0.0
        %330 = vmatpush1.msra.mxu0 0.0
        %331 = vmatprep.subr.mxu0 0.0
        %332 = vmatpush1.msra.mxu0 0.0
        %333 = vmatprep.subr.mxu0 0.0
        %334 = vmatpush1.msra.mxu0 %v301
        %335 = vmatprep.subr.mxu0 0.0
        %336 = vmatpush2.msra.mxu0 0.0
        %337 = vmatprep.subr.mxu0 0.0
        %338 = vmatpush2.msra.mxu0 0.0
        %339 = vmatprep.subr.mxu0 0.0
        %340 = vmatpush2.msra.mxu0 0.0
        %341 = vmatprep.subr.mxu0 0.0
        %342 = vmatpush2.msra.mxu0 0.0
        %343 = vmatprep.subr.mxu0 0.0
        %344 = vmatpush2.msra.mxu0 0.0
        %345 = vmatprep.subr.mxu0 0.0
        %346 = vmatpush2.msra.mxu0 0.0
        %347 = vmatprep.subr.mxu0 0.0
        %348 = vmatpush2.msra.mxu0 0.0
        %349 = vmatprep.subr.mxu0 0.0
        %350 = vmatpush2.msra.mxu0 0.0
        %351 = vmatprep.subr.mxu0 0.0
        %352 = vmatpush2.msra.mxu0 0.0
        %353 = vmatprep.subr.mxu0 0.0
        %354 = vmatpush2.msra.mxu0 0.0
        %355 = vmatprep.subr.mxu0 0.0
        %356 = vmatpush2.msra.mxu0 0.0
        %357 = vmatprep.subr.mxu0 0.0
        %358 = vmatpush2.msra.mxu0 0.0
        %359 = vmatprep.subr.mxu0 0.0
        %360 = vmatpush2.msra.mxu0 0.0
        %361 = vmatprep.subr.mxu0 0.0
        %362 = vmatpush2.msra.mxu0 0.0
        %363 = vmatprep.subr.mxu0 0.0
        %364 = vmatpush2.msra.mxu0 0.0
        %365 = vmatprep.subr.mxu0 0.0
        %366 = vmatpush2.msra.mxu0 0.0
        %367 = vmatprep.mubr.f32.mxu0 0.0
        %368 = vmatmul.mubr.f32.gmra.mxu0 %v294
        %v369 = vpop.f32.mrf.mxu0
        %v370 = vadd.f32 %v285, %v369
        %v371 = vpop.f32.mrf.mxu0
        %372 = vmatprep.mubr.f32.mxu0 0.0
        %373 = vmatmul.mubr.f32.gmra.mxu0 %v297
        %v374 = vpop.f32.mrf.mxu0
        %v375 = vadd.f32 %v290, %v374
        %v376 = vpop.f32.mrf.mxu0
        %377 = vdwg.mxu0
        %378 = vxpose.xlu0.b32.start [1/16] %v370, 128
        %379 = vxpose.xlu0.b32.cont [2/16] 0.0, 128
        %380 = vxpose.xlu0.b32.cont [3/16] 0.0, 128
        %381 = vxpose.xlu0.b32.cont [4/16] 0.0, 128
        %382 = vxpose.xlu0.b32.cont [5/16] 0.0, 128
        %383 = vxpose.xlu0.b32.cont [6/16] 0.0, 128
        %384 = vxpose.xlu0.b32.cont [7/16] 0.0, 128
        %385 = vxpose.xlu0.b32.cont [8/16] 0.0, 128
        %386 = vxpose.xlu0.b32.cont [9/16] 0.0, 128
        %387 = vxpose.xlu0.b32.cont [10/16] 0.0, 128
        %388 = vxpose.xlu0.b32.cont [11/16] 0.0, 128
        %389 = vxpose.xlu0.b32.cont [12/16] 0.0, 128
        %390 = vxpose.xlu0.b32.cont [13/16] 0.0, 128
        %391 = vxpose.xlu0.b32.cont [14/16] 0.0, 128
        %392 = vxpose.xlu0.b32.cont [15/16] 0.0, 128
        %393 = vxpose.xlu0.b32.end [16/16] 0.0, 128
        %v394 = vpop.trf.xlu0
        %v395 = vpop.trf.xlu0
        %v396 = vpop.trf.xlu0
        %v397 = vpop.trf.xlu0
        %v398 = vpop.trf.xlu0
        %v399 = vpop.trf.xlu0
        %v400 = vpop.trf.xlu0
        %v401 = vpop.trf.xlu0
        %v402 = vpop.trf.xlu0
        %v403 = vpop.trf.xlu0
        %v404 = vpop.trf.xlu0
        %v405 = vpop.trf.xlu0
        %v406 = vpop.trf.xlu0
        %v407 = vpop.trf.xlu0
        %v408 = vpop.trf.xlu0
        %v409 = vpop.trf.xlu0
        %v411 = vrot.slane %v370, 4
        %v413 = vsel %vm292, %v394, 0
        %v416 = vsel %vm292, %v395, 0
        %v419 = vsel %vm292, %v396, 0
        %v422 = vsel %vm292, %v397, 0
        %v425 = vsel %vm292, %v398, 0
        %v428 = vsel %vm292, %v399, 0
        %v431 = vsel %vm292, %v400, 0
        %v434 = vsel %vm292, %v401, 0
        %v437 = vsel %vm292, %v402, 0
        %v440 = vsel %vm292, %v403, 0
        %v443 = vsel %vm292, %v404, 0
        %v446 = vsel %vm292, %v405, 0
        %v449 = vsel %vm292, %v406, 0
        %v452 = vsel %vm292, %v407, 0
        %v455 = vsel %vm292, %v408, 0
        %v458 = vsel %vm292, %v409, 0
        %v460 = vsel %vm299, %v411, 0
        %462 = vmatprep.subr.mxu0 0.0
        %463 = vmatpush1.msra.mxu0 0.0
        %464 = vmatprep.subr.mxu0 0.0
        %465 = vmatpush1.msra.mxu0 0.0
        %466 = vmatprep.subr.mxu0 0.0
        %467 = vmatpush1.msra.mxu0 0.0
        %468 = vmatprep.subr.mxu0 0.0
        %469 = vmatpush1.msra.mxu0 0.0
        %470 = vmatprep.subr.mxu0 0.0
        %471 = vmatpush1.msra.mxu0 0.0
        %472 = vmatprep.subr.mxu0 0.0
        %473 = vmatpush1.msra.mxu0 0.0
        %474 = vmatprep.subr.mxu0 0.0
        %475 = vmatpush1.msra.mxu0 0.0
        %476 = vmatprep.subr.mxu0 0.0
        %477 = vmatpush1.msra.mxu0 0.0
        %478 = vmatprep.subr.mxu0 0.0
        %479 = vmatpush1.msra.mxu0 0.0
        %480 = vmatprep.subr.mxu0 0.0
        %481 = vmatpush1.msra.mxu0 0.0
        %482 = vmatprep.subr.mxu0 0.0
        %483 = vmatpush1.msra.mxu0 0.0
        %484 = vmatprep.subr.mxu0 0.0
        %485 = vmatpush1.msra.mxu0 0.0
        %486 = vmatprep.subr.mxu0 0.0
        %487 = vmatpush1.msra.mxu0 0.0
        %488 = vmatprep.subr.mxu0 0.0
        %489 = vmatpush1.msra.mxu0 0.0
        %490 = vmatprep.subr.mxu0 0.0
        %491 = vmatpush1.msra.mxu0 0.0
        %492 = vmatprep.subr.mxu0 0.0
        %493 = vmatpush1.msra.mxu0 %v460
        %494 = vmatprep.subr.mxu0 0.0
        %495 = vmatpush2.msra.mxu0 0.0
        %496 = vmatprep.subr.mxu0 0.0
        %497 = vmatpush2.msra.mxu0 0.0
        %498 = vmatprep.subr.mxu0 0.0
        %499 = vmatpush2.msra.mxu0 0.0
        %500 = vmatprep.subr.mxu0 0.0
        %501 = vmatpush2.msra.mxu0 0.0
        %502 = vmatprep.subr.mxu0 0.0
        %503 = vmatpush2.msra.mxu0 0.0
        %504 = vmatprep.subr.mxu0 0.0
        %505 = vmatpush2.msra.mxu0 0.0
        %506 = vmatprep.subr.mxu0 0.0
        %507 = vmatpush2.msra.mxu0 0.0
        %508 = vmatprep.subr.mxu0 0.0
        %509 = vmatpush2.msra.mxu0 0.0
        %510 = vmatprep.subr.mxu0 0.0
        %511 = vmatpush2.msra.mxu0 0.0
        %512 = vmatprep.subr.mxu0 0.0
        %513 = vmatpush2.msra.mxu0 0.0
        %514 = vmatprep.subr.mxu0 0.0
        %515 = vmatpush2.msra.mxu0 0.0
        %516 = vmatprep.subr.mxu0 0.0
        %517 = vmatpush2.msra.mxu0 0.0
        %518 = vmatprep.subr.mxu0 0.0
        %519 = vmatpush2.msra.mxu0 0.0
        %520 = vmatprep.subr.mxu0 0.0
        %521 = vmatpush2.msra.mxu0 0.0
        %522 = vmatprep.subr.mxu0 0.0
        %523 = vmatpush2.msra.mxu0 0.0
        %524 = vmatprep.subr.mxu0 0.0
        %525 = vmatpush2.msra.mxu0 0.0
        %526 = vmatprep.mubr.f32.mxu0 0.0
        %527 = vmatmul.mubr.f32.gmra.mxu0 %v413
        %v528 = vpop.f32.mrf.mxu0
        %v529 = vadd.f32 0.0, %v528
        %v530 = vpop.f32.mrf.mxu0
        %531 = vmatprep.mubr.f32.mxu0 0.0
        %532 = vmatmul.mubr.f32.gmra.mxu0 %v416
        %v533 = vpop.f32.mrf.mxu0
        %v534 = vadd.f32 0.0, %v533
        %v535 = vpop.f32.mrf.mxu0
        %536 = vmatprep.mubr.f32.mxu0 0.0
        %537 = vmatmul.mubr.f32.gmra.mxu0 %v419
        %v538 = vpop.f32.mrf.mxu0
        %v539 = vadd.f32 0.0, %v538
        %v540 = vpop.f32.mrf.mxu0
        %541 = vmatprep.mubr.f32.mxu0 0.0
        %542 = vmatmul.mubr.f32.gmra.mxu0 %v422
        %v543 = vpop.f32.mrf.mxu0
        %v544 = vadd.f32 0.0, %v543
        %v545 = vpop.f32.mrf.mxu0
        %546 = vmatprep.mubr.f32.mxu0 0.0
        %547 = vmatmul.mubr.f32.gmra.mxu0 %v425
        %v548 = vpop.f32.mrf.mxu0
        %v549 = vadd.f32 0.0, %v548
        %v550 = vpop.f32.mrf.mxu0
        %551 = vmatprep.mubr.f32.mxu0 0.0
        %552 = vmatmul.mubr.f32.gmra.mxu0 %v428
        %v553 = vpop.f32.mrf.mxu0
        %v554 = vadd.f32 0.0, %v553
        %v555 = vpop.f32.mrf.mxu0
        %556 = vmatprep.mubr.f32.mxu0 0.0
        %557 = vmatmul.mubr.f32.gmra.mxu0 %v431
        %v558 = vpop.f32.mrf.mxu0
        %v559 = vadd.f32 0.0, %v558
        %v560 = vpop.f32.mrf.mxu0
        %561 = vmatprep.mubr.f32.mxu0 0.0
        %562 = vmatmul.mubr.f32.gmra.mxu0 %v434
        %v563 = vpop.f32.mrf.mxu0
        %v564 = vadd.f32 0.0, %v563
        %v565 = vpop.f32.mrf.mxu0
        %566 = vmatprep.mubr.f32.mxu0 0.0
        %567 = vmatmul.mubr.f32.gmra.mxu0 %v437
        %v568 = vpop.f32.mrf.mxu0
        %v569 = vadd.f32 0.0, %v568
        %v570 = vpop.f32.mrf.mxu0
        %571 = vmatprep.mubr.f32.mxu0 0.0
        %572 = vmatmul.mubr.f32.gmra.mxu0 %v440
        %v573 = vpop.f32.mrf.mxu0
        %v574 = vadd.f32 0.0, %v573
        %v575 = vpop.f32.mrf.mxu0
        %576 = vmatprep.mubr.f32.mxu0 0.0
        %577 = vmatmul.mubr.f32.gmra.mxu0 %v443
        %v578 = vpop.f32.mrf.mxu0
        %v579 = vadd.f32 0.0, %v578
        %v580 = vpop.f32.mrf.mxu0
        %581 = vmatprep.mubr.f32.mxu0 0.0
        %582 = vmatmul.mubr.f32.gmra.mxu0 %v446
        %v583 = vpop.f32.mrf.mxu0
        %v584 = vadd.f32 0.0, %v583
        %v585 = vpop.f32.mrf.mxu0
        %586 = vmatprep.mubr.f32.mxu0 0.0
        %587 = vmatmul.mubr.f32.gmra.mxu0 %v449
        %v588 = vpop.f32.mrf.mxu0
        %v589 = vadd.f32 0.0, %v588
        %v590 = vpop.f32.mrf.mxu0
        %591 = vmatprep.mubr.f32.mxu0 0.0
        %592 = vmatmul.mubr.f32.gmra.mxu0 %v452
        %v593 = vpop.f32.mrf.mxu0
        %v594 = vadd.f32 0.0, %v593
        %v595 = vpop.f32.mrf.mxu0
        %596 = vmatprep.mubr.f32.mxu0 0.0
        %597 = vmatmul.mubr.f32.gmra.mxu0 %v455
        %v598 = vpop.f32.mrf.mxu0
        %v599 = vadd.f32 0.0, %v598
        %v600 = vpop.f32.mrf.mxu0
        %601 = vmatprep.mubr.f32.mxu0 0.0
        %602 = vmatmul.mubr.f32.gmra.mxu0 %v458
        %v603 = vpop.f32.mrf.mxu0
        %v604 = vadd.f32 0.0, %v603
        %v605 = vpop.f32.mrf.mxu0
        %606 = vdwg.mxu0
        %v607 = vmul.f32 %v529, 0.25
        %v608 = vmul.f32 %v534, 0.25
        %v609 = vmul.f32 %v539, 0.25
        %v610 = vmul.f32 %v544, 0.25
        %v611 = vmul.f32 %v549, 0.25
        %v612 = vmul.f32 %v554, 0.25
        %v613 = vmul.f32 %v559, 0.25
        %v614 = vmul.f32 %v564, 0.25
        %v615 = vmul.f32 %v569, 0.25
        %v616 = vmul.f32 %v574, 0.25
        %v617 = vmul.f32 %v579, 0.25
        %v618 = vmul.f32 %v584, 0.25
        %v619 = vmul.f32 %v589, 0.25
        %v620 = vmul.f32 %v594, 0.25
        %v621 = vmul.f32 %v599, 0.25
        %v622 = vmul.f32 %v604, 0.25
        %v623 = vld [vmem:[#allocation2] sm:$0xff]
        %v624 = vld [vmem:[#allocation2 + $0x8] sm:$0xff]
        %v625 = vld [vmem:[#allocation2 + $0x10] sm:$0xff]
        %v626 = vld [vmem:[#allocation2 + $0x18] sm:$0xff]
        %v627 = vld [vmem:[#allocation2 + $0x20] sm:$0xff]
        %v628 = vld [vmem:[#allocation2 + $0x28] sm:$0xff]
        %v629 = vld [vmem:[#allocation2 + $0x30] sm:$0xff]
        %v630 = vld [vmem:[#allocation2 + $0x38] sm:$0xff]
        %v631 = vld [vmem:[#allocation2 + $0x40] sm:$0xff]
        %v632 = vld [vmem:[#allocation2 + $0x48] sm:$0xff]
        %v633 = vld [vmem:[#allocation2 + $0x50] sm:$0xff]
        %v634 = vld [vmem:[#allocation2 + $0x58] sm:$0xff]
        %v635 = vld [vmem:[#allocation2 + $0x60] sm:$0xff]
        %v636 = vld [vmem:[#allocation2 + $0x68] sm:$0xff]
        %v637 = vld [vmem:[#allocation2 + $0x70] sm:$0xff]
        %v638 = vld [vmem:[#allocation2 + $0x78] sm:$0xff]
        %v639 = vadd.f32 %v607, %v623
        %v640 = vadd.f32 %v608, %v624
        %v641 = vadd.f32 %v609, %v625
        %v642 = vadd.f32 %v610, %v626
        %v643 = vadd.f32 %v611, %v627
        %v644 = vadd.f32 %v612, %v628
        %v645 = vadd.f32 %v613, %v629
        %v646 = vadd.f32 %v614, %v630
        %v647 = vadd.f32 %v615, %v631
        %v648 = vadd.f32 %v616, %v632
        %v649 = vadd.f32 %v617, %v633
        %v650 = vadd.f32 %v618, %v634
        %v651 = vadd.f32 %v619, %v635
        %v652 = vadd.f32 %v620, %v636
        %v653 = vadd.f32 %v621, %v637
        %v654 = vadd.f32 %v622, %v638
        %655 = vmax.xlane.f32.xlu0 %v639
        %v656 = vpop.xlane.xlu0 %655
        %657 = vmax.xlane.f32.xlu0 %v640
        %v658 = vpop.xlane.xlu0 %657
        %659 = vmax.xlane.f32.xlu0 %v641
        %v660 = vpop.xlane.xlu0 %659
        %661 = vmax.xlane.f32.xlu0 %v642
        %v662 = vpop.xlane.xlu0 %661
        %663 = vmax.xlane.f32.xlu0 %v643
        %v664 = vpop.xlane.xlu0 %663
        %665 = vmax.xlane.f32.xlu0 %v644
        %v666 = vpop.xlane.xlu0 %665
        %667 = vmax.xlane.f32.xlu0 %v645
        %v668 = vpop.xlane.xlu0 %667
        %669 = vmax.xlane.f32.xlu0 %v646
        %v670 = vpop.xlane.xlu0 %669
        %671 = vmax.xlane.f32.xlu0 %v647
        %v672 = vpop.xlane.xlu0 %671
        %673 = vmax.xlane.f32.xlu0 %v648
        %v674 = vpop.xlane.xlu0 %673
        %675 = vmax.xlane.f32.xlu0 %v649
        %v676 = vpop.xlane.xlu0 %675
        %677 = vmax.xlane.f32.xlu0 %v650
        %v678 = vpop.xlane.xlu0 %677
        %679 = vmax.xlane.f32.xlu0 %v651
        %v680 = vpop.xlane.xlu0 %679
        %681 = vmax.xlane.f32.xlu0 %v652
        %v682 = vpop.xlane.xlu0 %681
        %683 = vmax.xlane.f32.xlu0 %v653
        %v684 = vpop.xlane.xlu0 %683
        %685 = vmax.xlane.f32.xlu0 %v654
        %v686 = vpop.xlane.xlu0 %685
        %v687 = vsub.f32 %v639, %v656
        %v688 = vsub.f32 %v640, %v658
        %v689 = vsub.f32 %v641, %v660
        %v690 = vsub.f32 %v642, %v662
        %v691 = vsub.f32 %v643, %v664
        %v692 = vsub.f32 %v644, %v666
        %v693 = vsub.f32 %v645, %v668
        %v694 = vsub.f32 %v646, %v670
        %v695 = vsub.f32 %v647, %v672
        %v696 = vsub.f32 %v648, %v674
        %v697 = vsub.f32 %v649, %v676
        %v698 = vsub.f32 %v650, %v678
        %v699 = vsub.f32 %v651, %v680
        %v700 = vsub.f32 %v652, %v682
        %v701 = vsub.f32 %v653, %v684
        %v702 = vsub.f32 %v654, %v686
        %v703 = vmul.f32 %v687, 1.442695
        %v704 = vpow.pop %v703
        %v705 = vmul.f32 %v688, 1.442695
        %v706 = vpow.pop %v705
        %v707 = vmul.f32 %v689, 1.442695
        %v708 = vpow.pop %v707
        %v709 = vmul.f32 %v690, 1.442695
        %v710 = vpow.pop %v709
        %v711 = vmul.f32 %v691, 1.442695
        %v712 = vpow.pop %v711
        %v713 = vmul.f32 %v692, 1.442695
        %v714 = vpow.pop %v713
        %v715 = vmul.f32 %v693, 1.442695
        %v716 = vpow.pop %v715
        %v717 = vmul.f32 %v694, 1.442695
        %v718 = vpow.pop %v717
        %v719 = vmul.f32 %v695, 1.442695
        %v720 = vpow.pop %v719
        %v721 = vmul.f32 %v696, 1.442695
        %v722 = vpow.pop %v721
        %v723 = vmul.f32 %v697, 1.442695
        %v724 = vpow.pop %v723
        %v725 = vmul.f32 %v698, 1.442695
        %v726 = vpow.pop %v725
        %v727 = vmul.f32 %v699, 1.442695
        %v728 = vpow.pop %v727
        %v729 = vmul.f32 %v700, 1.442695
        %v730 = vpow.pop %v729
        %v731 = vmul.f32 %v701, 1.442695
        %v732 = vpow.pop %v731
        %v733 = vmul.f32 %v702, 1.442695
        %v734 = vpow.pop %v733
        %735 = vadd.xlane.f32.xlu0 %v704
        %v736 = vpop.xlane.xlu0 %735
        %737 = vadd.xlane.f32.xlu0 %v706
        %v738 = vpop.xlane.xlu0 %737
        %739 = vadd.xlane.f32.xlu0 %v708
        %v740 = vpop.xlane.xlu0 %739
        %741 = vadd.xlane.f32.xlu0 %v710
        %v742 = vpop.xlane.xlu0 %741
        %743 = vadd.xlane.f32.xlu0 %v712
        %v744 = vpop.xlane.xlu0 %743
        %745 = vadd.xlane.f32.xlu0 %v714
        %v746 = vpop.xlane.xlu0 %745
        %747 = vadd.xlane.f32.xlu0 %v716
        %v748 = vpop.xlane.xlu0 %747
        %749 = vadd.xlane.f32.xlu0 %v718
        %v750 = vpop.xlane.xlu0 %749
        %751 = vadd.xlane.f32.xlu0 %v720
        %v752 = vpop.xlane.xlu0 %751
        %753 = vadd.xlane.f32.xlu0 %v722
        %v754 = vpop.xlane.xlu0 %753
        %755 = vadd.xlane.f32.xlu0 %v724
        %v756 = vpop.xlane.xlu0 %755
        %757 = vadd.xlane.f32.xlu0 %v726
        %v758 = vpop.xlane.xlu0 %757
        %759 = vadd.xlane.f32.xlu0 %v728
        %v760 = vpop.xlane.xlu0 %759
        %761 = vadd.xlane.f32.xlu0 %v730
        %v762 = vpop.xlane.xlu0 %761
        %763 = vadd.xlane.f32.xlu0 %v732
        %v764 = vpop.xlane.xlu0 %763
        %765 = vadd.xlane.f32.xlu0 %v734
        %v766 = vpop.xlane.xlu0 %765
        %v767 = vrcp.pop %v736
        %v768 = vrcp.pop %v738
        %v769 = vrcp.pop %v740
        %v770 = vrcp.pop %v742
        %v771 = vrcp.pop %v744
        %v772 = vrcp.pop %v746
        %v773 = vrcp.pop %v748
        %v774 = vrcp.pop %v750
        %v775 = vrcp.pop %v752
        %v776 = vrcp.pop %v754
        %v777 = vrcp.pop %v756
        %v778 = vrcp.pop %v758
        %v779 = vrcp.pop %v760
        %v780 = vrcp.pop %v762
        %v781 = vrcp.pop %v764
        %v782 = vrcp.pop %v766
        %v783 = vmul.f32 %v704, %v767
        %v784 = vmul.f32 %v706, %v768
        %v785 = vmul.f32 %v708, %v769
        %v786 = vmul.f32 %v710, %v770
        %v787 = vmul.f32 %v712, %v771
        %v788 = vmul.f32 %v714, %v772
        %v789 = vmul.f32 %v716, %v773
        %v790 = vmul.f32 %v718, %v774
        %v791 = vmul.f32 %v720, %v775
        %v792 = vmul.f32 %v722, %v776
        %v793 = vmul.f32 %v724, %v777
        %v794 = vmul.f32 %v726, %v778
        %v795 = vmul.f32 %v728, %v779
        %v796 = vmul.f32 %v730, %v780
        %v797 = vmul.f32 %v732, %v781
        %v798 = vmul.f32 %v734, %v782
        %799 = vmatprep.subr.mxu0 0.0
        %800 = vmatpush1.xpose.msra.mxu0 %v798
        %801 = vmatprep.subr.mxu0 0.0
        %802 = vmatpush1.xpose.msra.mxu0 %v797
        %803 = vmatprep.subr.mxu0 0.0
        %804 = vmatpush1.xpose.msra.mxu0 %v796
        %805 = vmatprep.subr.mxu0 0.0
        %806 = vmatpush1.xpose.msra.mxu0 %v795
        %807 = vmatprep.subr.mxu0 0.0
        %808 = vmatpush1.xpose.msra.mxu0 %v794
        %809 = vmatprep.subr.mxu0 0.0
        %810 = vmatpush1.xpose.msra.mxu0 %v793
        %811 = vmatprep.subr.mxu0 0.0
        %812 = vmatpush1.xpose.msra.mxu0 %v792
        %813 = vmatprep.subr.mxu0 0.0
        %814 = vmatpush1.xpose.msra.mxu0 %v791
        %815 = vmatprep.subr.mxu0 0.0
        %816 = vmatpush1.xpose.msra.mxu0 %v790
        %817 = vmatprep.subr.mxu0 0.0
        %818 = vmatpush1.xpose.msra.mxu0 %v789
        %819 = vmatprep.subr.mxu0 0.0
        %820 = vmatpush1.xpose.msra.mxu0 %v788
        %821 = vmatprep.subr.mxu0 0.0
        %822 = vmatpush1.xpose.msra.mxu0 %v787
        %823 = vmatprep.subr.mxu0 0.0
        %824 = vmatpush1.xpose.msra.mxu0 %v786
        %825 = vmatprep.subr.mxu0 0.0
        %826 = vmatpush1.xpose.msra.mxu0 %v785
        %827 = vmatprep.subr.mxu0 0.0
        %828 = vmatpush1.xpose.msra.mxu0 %v784
        %829 = vmatprep.subr.mxu0 0.0
        %830 = vmatpush1.xpose.msra.mxu0 %v783
        %831 = vmatprep.subr.mxu0 0.0
        %832 = vmatpush2.xpose.msra.mxu0 0.0
        %833 = vmatprep.subr.mxu0 0.0
        %834 = vmatpush2.xpose.msra.mxu0 0.0
        %835 = vmatprep.subr.mxu0 0.0
        %836 = vmatpush2.xpose.msra.mxu0 0.0
        %837 = vmatprep.subr.mxu0 0.0
        %838 = vmatpush2.xpose.msra.mxu0 0.0
        %839 = vmatprep.subr.mxu0 0.0
        %840 = vmatpush2.xpose.msra.mxu0 0.0
        %841 = vmatprep.subr.mxu0 0.0
        %842 = vmatpush2.xpose.msra.mxu0 0.0
        %843 = vmatprep.subr.mxu0 0.0
        %844 = vmatpush2.xpose.msra.mxu0 0.0
        %845 = vmatprep.subr.mxu0 0.0
        %846 = vmatpush2.xpose.msra.mxu0 0.0
        %847 = vmatprep.subr.mxu0 0.0
        %848 = vmatpush2.xpose.msra.mxu0 0.0
        %849 = vmatprep.subr.mxu0 0.0
        %850 = vmatpush2.xpose.msra.mxu0 0.0
        %851 = vmatprep.subr.mxu0 0.0
        %852 = vmatpush2.xpose.msra.mxu0 0.0
        %853 = vmatprep.subr.mxu0 0.0
        %854 = vmatpush2.xpose.msra.mxu0 0.0
        %855 = vmatprep.subr.mxu0 0.0
        %856 = vmatpush2.xpose.msra.mxu0 0.0
        %857 = vmatprep.subr.mxu0 0.0
        %858 = vmatpush2.xpose.msra.mxu0 0.0
        %859 = vmatprep.subr.mxu0 0.0
        %860 = vmatpush2.xpose.msra.mxu0 0.0
        %861 = vmatprep.subr.mxu0 0.0
        %862 = vmatpush2.xpose.msra.mxu0 0.0
        %863 = vmatprep.mubr.f32.mxu0 0.0
        %864 = vmatmul.mubr.f32.gmra.mxu0 %v375
        %v865 = vpop.f32.mrf.mxu0
        %v866 = vadd.f32 0.0, %v865
        %v867 = vpop.f32.mrf.mxu0
        %868 = vdwg.mxu0
        %v869 = vld [vmem:[#allocation5] sm:$0xff]
        %v870 = vld [vmem:[#allocation5 + $0x8] sm:$0xff]
        %v871 = vld [vmem:[#allocation5 + $0x10] sm:$0xff]
        %v872 = vld [vmem:[#allocation5 + $0x18] sm:$0xff]
        %v873 = vld [vmem:[#allocation5 + $0x20] sm:$0xff]
        %v874 = vld [vmem:[#allocation5 + $0x28] sm:$0xff]
        %v875 = vld [vmem:[#allocation5 + $0x30] sm:$0xff]
        %v876 = vld [vmem:[#allocation5 + $0x38] sm:$0xff]
        %v877 = vld [vmem:[#allocation5 + $0x40] sm:$0xff]
        %v878 = vld [vmem:[#allocation5 + $0x48] sm:$0xff]
        %v879 = vld [vmem:[#allocation5 + $0x50] sm:$0xff]
        %v880 = vld [vmem:[#allocation5 + $0x58] sm:$0xff]
        %v881 = vld [vmem:[#allocation5 + $0x60] sm:$0xff]
        %v882 = vld [vmem:[#allocation5 + $0x68] sm:$0xff]
        %v883 = vld [vmem:[#allocation5 + $0x70] sm:$0xff]
        %v884 = vld [vmem:[#allocation5 + $0x78] sm:$0xff]
        %v885 = vld [vmem:[%s5] sm:$0x1]
        %v887 = vlaneseq
        %v888 = vshrl.u32 %v887, 7
        %v889 = vsub.s32 0, %v888
        %v890 = vrot.slane %v885, %v889
        %892 = vmatprep.subr.mxu0 0.0
        %893 = vmatpush1.msra.mxu0 %v884
        %894 = vmatprep.subr.mxu0 0.0
        %895 = vmatpush1.msra.mxu0 %v883
        %896 = vmatprep.subr.mxu0 0.0
        %897 = vmatpush1.msra.mxu0 %v882
        %898 = vmatprep.subr.mxu0 0.0
        %899 = vmatpush1.msra.mxu0 %v881
        %900 = vmatprep.subr.mxu0 0.0
        %901 = vmatpush1.msra.mxu0 %v880
        %902 = vmatprep.subr.mxu0 0.0
        %903 = vmatpush1.msra.mxu0 %v879
        %904 = vmatprep.subr.mxu0 0.0
        %905 = vmatpush1.msra.mxu0 %v878
        %906 = vmatprep.subr.mxu0 0.0
        %907 = vmatpush1.msra.mxu0 %v877
        %908 = vmatprep.subr.mxu0 0.0
        %909 = vmatpush1.msra.mxu0 %v876
        %910 = vmatprep.subr.mxu0 0.0
        %911 = vmatpush1.msra.mxu0 %v875
        %912 = vmatprep.subr.mxu0 0.0
        %913 = vmatpush1.msra.mxu0 %v874
        %914 = vmatprep.subr.mxu0 0.0
        %915 = vmatpush1.msra.mxu0 %v873
        %916 = vmatprep.subr.mxu0 0.0
        %917 = vmatpush1.msra.mxu0 %v872
        %918 = vmatprep.subr.mxu0 0.0
        %919 = vmatpush1.msra.mxu0 %v871
        %920 = vmatprep.subr.mxu0 0.0
        %921 = vmatpush1.msra.mxu0 %v870
        %922 = vmatprep.subr.mxu0 0.0
        %923 = vmatpush1.msra.mxu0 %v869
        %924 = vmatprep.subr.mxu0 0.0
        %925 = vmatpush2.msra.mxu0 0.0
        %926 = vmatprep.subr.mxu0 0.0
        %927 = vmatpush2.msra.mxu0 0.0
        %928 = vmatprep.subr.mxu0 0.0
        %929 = vmatpush2.msra.mxu0 0.0
        %930 = vmatprep.subr.mxu0 0.0
        %931 = vmatpush2.msra.mxu0 0.0
        %932 = vmatprep.subr.mxu0 0.0
        %933 = vmatpush2.msra.mxu0 0.0
        %934 = vmatprep.subr.mxu0 0.0
        %935 = vmatpush2.msra.mxu0 0.0
        %936 = vmatprep.subr.mxu0 0.0
        %937 = vmatpush2.msra.mxu0 0.0
        %938 = vmatprep.subr.mxu0 0.0
        %939 = vmatpush2.msra.mxu0 0.0
        %940 = vmatprep.subr.mxu0 0.0
        %941 = vmatpush2.msra.mxu0 0.0
        %942 = vmatprep.subr.mxu0 0.0
        %943 = vmatpush2.msra.mxu0 0.0
        %944 = vmatprep.subr.mxu0 0.0
        %945 = vmatpush2.msra.mxu0 0.0
        %946 = vmatprep.subr.mxu0 0.0
        %947 = vmatpush2.msra.mxu0 0.0
        %948 = vmatprep.subr.mxu0 0.0
        %949 = vmatpush2.msra.mxu0 0.0
        %950 = vmatprep.subr.mxu0 0.0
        %951 = vmatpush2.msra.mxu0 0.0
        %952 = vmatprep.subr.mxu0 0.0
        %953 = vmatpush2.msra.mxu0 0.0
        %954 = vmatprep.subr.mxu0 0.0
        %955 = vmatpush2.msra.mxu0 0.0
        %956 = vmatprep.mubr.f32.mxu0 0.0
        %957 = vmatmul.mubr.f32.gmra.mxu0 %v866
        %v958 = vpop.f32.mrf.mxu0
        %v959 = vadd.f32 %v890, %v958
        %v960 = vpop.f32.mrf.mxu0
        %961 = vdwg.mxu0
        %962 = vst [vmem:[%s272] sm:$0xf] %v959
        %s963 = sand.u32 %s161, 1
        %s964 = scalar_lea.sflag [#allocation4], %s963
        %s965 = sand.u32 %s161, 1
        %s966 = smul.addr %s965, 4
        %s967 = scalar_lea.vmem [#allocation7], %s966
        // Predicated region
        $region53: #{tpu_custom_call.1} parent=43 // pred_check
          %p968 = pneg %p171
        $region54: #{tpu_custom_call.1} parent=43 // pred_check_branch
          %970 = sbr.rel (%p968) target = $region56
        $region55: #{tpu_custom_call.1} parent=43 // pred_region
          %s972 = ssub.s32 64, 64
          %973 = vsyncadd %s964, %s972
          %s974 = smul.addr %s22, 64
          %s975 = scalar_lea.hbm %s6, %s974
          %s977 = sshll.u32 %s967, 4
          %s978 = int_to_ptr.vmem [resolvable:$true] %s977
          %980 = dma.vmem_to_hbm [thread:$0]  %s978, 64, %s975, %s964
        $region56: #{tpu_custom_call.1} parent=43 // pred_fallthru
          _
      $region44: #{tpu_custom_call.1} parent=5 // pred_fallthru
        _
      %p981 = scmp.le.s32.totalorder 2, %s17
      // Predicated region
      $region57: #{tpu_custom_call.1} parent=5 // pred_check
        %p982 = pneg %p981
      $region58: #{tpu_custom_call.1} parent=5 // pred_check_branch
        %984 = sbr.rel (%p982) target = $region60
      $region59: #{tpu_custom_call.1} parent=5 // pred_region
        %s985 = ssub.s32 %s17, 2
        // Predicated region
        $region61: #{tpu_custom_call.1} parent=59 // pred_check
          %p986 = pneg %p177
        $region62: #{tpu_custom_call.1} parent=59 // pred_check_branch
          %988 = sbr.rel (%p986) target = $region64
        $region63: #{tpu_custom_call.1} parent=59 // pred_region
          %s989 = sand.u32 %s162, 1
          %s990 = scalar_lea.sflag [#allocation4], %s989
          %s991 = sand.u32 %s162, 1
          %s992 = smul.addr %s991, 4
          %s993 = scalar_lea.vmem [#allocation7], %s992
          %994 = dma.done %s990, 64
        $region64: #{tpu_custom_call.1} parent=59 // pred_fallthru
          _
      $region60: #{tpu_custom_call.1} parent=5 // pred_fallthru
        _
    $region6: #{tpu_custom_call.1} parent=1 // loop_footer
      %s21 = sadd.s32 1, %s17
    $region7: #{tpu_custom_call.1} parent=1 // loop_footer_branch
      %16 = sbr.rel target = $region3
    $region8: #{tpu_custom_call.1} parent=1 // loop_exit
      _
    %995 = vsyncpa [#allocation3], 1
    %s996 = scalar_lea.sflag [#allocation3], 1
    %997 = vsyncpa %s996, 1
    %998 = vsyncpa [#allocation6], 1
    %999 = vsyncpa [#allocation4], 1
    %s1000 = scalar_lea.sflag [#allocation4], 1
    %1001 = vsyncpa %s1000, 1

</llo_original>
